<compile_context>
chip_gen: v5e
topology: v5e:2x2
jax: 0.10.0
libtpu: 0.0.40
codegen_flags: <defaults>
</compile_context>

<pallas_src>
import functools

import jax
import jax.numpy as jnp
from jax import lax
from jax.experimental import pallas as pl
from jax.experimental.pallas import tpu as pltpu


def _sablock_kernel(xq_ref, xkv_ref, wq_ref, wk_ref, wv_ref, wout_ref,
                    bout_ref, o_ref, heads_ref, *,
                    num_heads: int, head_dim: int, scale: float):
    # xq_ref:  (1, tq, D)  query-token tile
    # xkv_ref: (1, N,  D)  all tokens of this batch element (for K/V)
    # wq/wk/wv_ref: (H, D, hd) per-head projection weights
    # wout_ref: (D, D), bout_ref: (1, D)
    # heads_ref: (tq, D) f32 VMEM scratch holding the per-head concat
    xq = xq_ref[0]        # (tq, D)
    xkv = xkv_ref[0]      # (N,  D)
    H, hd = num_heads, head_dim

    # Per-head attention.  H is small here; each head's result is committed to
    # the scratch ref before the next head, which keeps only one (tq, N) score
    # tile worth of values live at a time.
    for h in range(H):
        q = jnp.dot(xq, wq_ref[h], preferred_element_type=jnp.float32) * scale  # (tq, hd)
        k = jnp.dot(xkv, wk_ref[h], preferred_element_type=jnp.float32)          # (N, hd)
        v = jnp.dot(xkv, wv_ref[h], preferred_element_type=jnp.float32)          # (N, hd)

        # scores + numerically stable softmax over keys
        s = lax.dot_general(q, k, (((1,), (1,)), ((), ())),
                            preferred_element_type=jnp.float32)                  # (tq, N)
        s = s - jnp.max(s, axis=-1, keepdims=True)
        p = jnp.exp(s)
        p = p * pl.reciprocal(jnp.sum(p, axis=-1, keepdims=True), approx=True)

        # head output -> its column block of the concat scratch (static offset)
        heads_ref[:, h * hd:(h + 1) * hd] = jnp.dot(
            p, v, preferred_element_type=jnp.float32)                            # (tq, hd)

    # single full-depth out_proj matmul + bias
    out = jnp.dot(heads_ref[...], wout_ref[...],
                  preferred_element_type=jnp.float32)                            # (tq, D)
    o_ref[0] = (out + bout_ref[...]).astype(o_ref.dtype)


def sablock_pallas(x, wqkv, wout, bout, *, num_heads: int):
    B, N, D = x.shape
    H = num_heads
    hd = D // H
    scale = float(hd) ** (-0.5)

    # Split the fused qkv weight into per-head Wq/Wk/Wv (H, D, hd).
    # Column layout of wqkv matches rearrange 'b h (qkv l d) -> qkv b l h d':
    # col = (component * H + head) * hd + d.
    w = wqkv.reshape(D, 3, H, hd)
    wq = jnp.transpose(w[:, 0], (1, 0, 2))   # (H, D, hd)
    wk = jnp.transpose(w[:, 1], (1, 0, 2))
    wv = jnp.transpose(w[:, 2], (1, 0, 2))

    # Query tiling: stream tq-token query tiles; K/V use the full sequence.
    tq = 128 if (N % 128 == 0) else N
    nq = N // tq

    kernel = functools.partial(_sablock_kernel, num_heads=H, head_dim=hd,
                               scale=scale)

    return pl.pallas_call(
        kernel,
        out_shape=jax.ShapeDtypeStruct((B, N, D), x.dtype),
        grid=(B, nq),
        in_specs=[
            pl.BlockSpec((1, tq, D), lambda b, qi: (b, qi, 0)),   # x (query tile)
            pl.BlockSpec((1, N, D), lambda b, qi: (b, 0, 0)),     # x (full, for K/V)
            pl.BlockSpec((H, D, hd), lambda b, qi: (0, 0, 0)),    # Wq
            pl.BlockSpec((H, D, hd), lambda b, qi: (0, 0, 0)),    # Wk
            pl.BlockSpec((H, D, hd), lambda b, qi: (0, 0, 0)),    # Wv
            pl.BlockSpec((D, D), lambda b, qi: (0, 0)),           # W_out
            pl.BlockSpec((1, D), lambda b, qi: (0, 0)),           # b_out
        ],
        out_specs=pl.BlockSpec((1, tq, D), lambda b, qi: (b, qi, 0)),
        scratch_shapes=[pltpu.VMEM((tq, D), jnp.float32)],
        compiler_params=pltpu.CompilerParams(
            dimension_semantics=("parallel", "parallel"),
            vmem_limit_bytes=64 * 1024 * 1024,
        ),
    )(x, x, wq, wk, wv, wout, bout)


def sablock_reference(x, wqkv, wout, bout, *, num_heads: int):
    """Plain-JAX reference reproducing the PyTorch forward exactly."""
    B, N, D = x.shape
    hd = D // num_heads
    scale = float(hd) ** (-0.5)
    qkv = jnp.einsum('bnd,de->bne', x, wqkv)                       # (B, N, 3D)
    qkv = qkv.reshape(B, N, 3, num_heads, hd)
    qkv = jnp.transpose(qkv, (2, 0, 3, 1, 4))                      # (qkv, B, H, N, hd)
    q, k, v = qkv[0], qkv[1], qkv[2]
    att = jnp.einsum('blxd,blyd->blxy', q, k) * scale
    att = jax.nn.softmax(att, axis=-1)
    out = jnp.einsum('bhxy,bhyd->bhxd', att, v)                    # (B, H, N, hd)
    out = jnp.transpose(out, (0, 2, 1, 3)).reshape(B, N, D)        # b l (h d)
    return jnp.einsum('bnd,de->bne', out, wout) + bout[0]


if __name__ == "__main__":
    # Small shapes consistent with the module: dim=32, num_heads=4, seq=16, batch=2.
    B, N, D, H = 2, 16, 32, 4

    key = jax.random.PRNGKey(0)
    kx, kqkv, kwo, kbo = jax.random.split(key, 4)

    x = jax.random.normal(kx, (B, N, D), dtype=jnp.float32)
    wqkv = jax.random.normal(kqkv, (D, 3 * D), dtype=jnp.float32) * 0.05  # qkv: Linear(dim, 3*dim, bias=False)
    wout = jax.random.normal(kwo, (D, D), dtype=jnp.float32) * 0.05       # out_proj weight
    bout = jax.random.normal(kbo, (1, D), dtype=jnp.float32) * 0.05       # out_proj bias

    out = sablock_pallas(x, wqkv, wout, bout, num_heads=H)
    out = jax.block_until_ready(out)

    ref = sablock_reference(x, wqkv, wout, bout, num_heads=H)
    assert out.shape == (B, N, D)
    # Tolerance slightly loosened vs. 1e-4 because of pl.reciprocal(approx=True).
    assert jnp.allclose(out, ref, atol=5e-3, rtol=5e-3), "mismatch vs reference"

    print("KERNEL_OK")
</pallas_src>

<mosaic_0001>
module attributes {stable_mosaic.version = 11 : i64} {
  func.func @_sablock_kernel(%arg0: i32, %arg1: i32, %arg2: memref<1x16x32xf32, #tpu.memory_space<vmem>>, %arg3: memref<1x16x32xf32, #tpu.memory_space<vmem>>, %arg4: memref<4x32x8xf32, #tpu.memory_space<vmem>>, %arg5: memref<4x32x8xf32, #tpu.memory_space<vmem>>, %arg6: memref<4x32x8xf32, #tpu.memory_space<vmem>>, %arg7: memref<32x32xf32, #tpu.memory_space<vmem>>, %arg8: memref<1x32xf32, #tpu.memory_space<vmem>>, %arg9: memref<1x16x32xf32, #tpu.memory_space<vmem>>, %arg10: memref<16x32xf32, #tpu.memory_space<vmem>>) attributes {dimension_semantics = [#tpu.dimension_semantics<parallel>, #tpu.dimension_semantics<parallel>], iteration_bounds = array<i64: 2, 1>, scalar_prefetch = 0 : i64, scratch_operands = 1 : i64, tpu.core_type = #tpu.core_type<tc>, window_params = [{transform_indices = @transform_0, window_bounds = array<i64: 1, 16, 32>}, {transform_indices = @transform_1, window_bounds = array<i64: 1, 16, 32>}, {pipeline_mode = #tpu.pipeline_mode<synchronous>, transform_indices = @transform_2, window_bounds = array<i64: 4, 32, 8>}, {pipeline_mode = #tpu.pipeline_mode<synchronous>, transform_indices = @transform_3, window_bounds = array<i64: 4, 32, 8>}, {pipeline_mode = #tpu.pipeline_mode<synchronous>, transform_indices = @transform_4, window_bounds = array<i64: 4, 32, 8>}, {pipeline_mode = #tpu.pipeline_mode<synchronous>, transform_indices = @transform_5, window_bounds = array<i64: 32, 32>}, {pipeline_mode = #tpu.pipeline_mode<synchronous>, transform_indices = @transform_6, window_bounds = array<i64: 1, 32>}, {transform_indices = @transform_7, window_bounds = array<i64: 1, 16, 32>}]} {
    %c0 = arith.constant 0 : index
    %c0_0 = arith.constant 0 : index
    %c0_1 = arith.constant 0 : index
    %0 = vector.load %arg2[%c0, %c0_0, %c0_1] : memref<1x16x32xf32, #tpu.memory_space<vmem>>, vector<1x16x32xf32>
    %1 = vector.shape_cast %0 : vector<1x16x32xf32> to vector<16x32xf32>
    %c0_2 = arith.constant 0 : index
    %c0_3 = arith.constant 0 : index
    %c0_4 = arith.constant 0 : index
    %2 = vector.load %arg3[%c0_2, %c0_3, %c0_4] : memref<1x16x32xf32, #tpu.memory_space<vmem>>, vector<1x16x32xf32>
    %3 = vector.shape_cast %2 : vector<1x16x32xf32> to vector<16x32xf32>
    %c0_5 = arith.constant 0 : index
    %c0_6 = arith.constant 0 : index
    %c0_7 = arith.constant 0 : index
    %4 = vector.load %arg4[%c0_5, %c0_6, %c0_7] : memref<4x32x8xf32, #tpu.memory_space<vmem>>, vector<1x32x8xf32>
    %5 = vector.shape_cast %4 : vector<1x32x8xf32> to vector<32x8xf32>
    %cst = arith.constant dense<0.000000e+00> : vector<16x8xf32>
    %6 = tpu.matmul %1, %5, %cst {dimension_numbers = #tpu.dot_dimension_numbers<[1], [0], [0], [1], [0, 0, 1, 1], [], []>} : vector<16x32xf32>, vector<32x8xf32>, vector<16x8xf32> -> vector<16x8xf32>
    %cst_8 = arith.constant 0.353553385 : f32
    %7 = vector.broadcast %cst_8 : f32 to vector<16x8xf32>
    %8 = arith.mulf %6, %7 : vector<16x8xf32>
    %c0_9 = arith.constant 0 : index
    %c0_10 = arith.constant 0 : index
    %c0_11 = arith.constant 0 : index
    %9 = vector.load %arg5[%c0_9, %c0_10, %c0_11] : memref<4x32x8xf32, #tpu.memory_space<vmem>>, vector<1x32x8xf32>
    %10 = vector.shape_cast %9 : vector<1x32x8xf32> to vector<32x8xf32>
    %cst_12 = arith.constant dense<0.000000e+00> : vector<16x8xf32>
    %11 = tpu.matmul %3, %10, %cst_12 {dimension_numbers = #tpu.dot_dimension_numbers<[1], [0], [0], [1], [0, 0, 1, 1], [], []>} : vector<16x32xf32>, vector<32x8xf32>, vector<16x8xf32> -> vector<16x8xf32>
    %c0_13 = arith.constant 0 : index
    %c0_14 = arith.constant 0 : index
    %c0_15 = arith.constant 0 : index
    %12 = vector.load %arg6[%c0_13, %c0_14, %c0_15] : memref<4x32x8xf32, #tpu.memory_space<vmem>>, vector<1x32x8xf32>
    %13 = vector.shape_cast %12 : vector<1x32x8xf32> to vector<32x8xf32>
    %cst_16 = arith.constant dense<0.000000e+00> : vector<16x8xf32>
    %14 = tpu.matmul %3, %13, %cst_16 {dimension_numbers = #tpu.dot_dimension_numbers<[1], [0], [0], [1], [0, 0, 1, 1], [], []>} : vector<16x32xf32>, vector<32x8xf32>, vector<16x8xf32> -> vector<16x8xf32>
    %cst_17 = arith.constant dense<0.000000e+00> : vector<16x16xf32>
    %15 = tpu.matmul %8, %11, %cst_17 {dimension_numbers = #tpu.dot_dimension_numbers<[1], [1], [0], [0], [0, 0, 1, 0], [], []>} : vector<16x8xf32>, vector<16x8xf32>, vector<16x16xf32> -> vector<16x16xf32>
    %cst_18 = arith.constant dense<0xFF800000> : vector<16xf32>
    %16 = vector.multi_reduction <maximumf>, %15, %cst_18 [1] : vector<16x16xf32> to vector<16xf32>
    %17 = vector.shape_cast %16 : vector<16xf32> to vector<16x1xf32>
    %18 = vector.broadcast %17 : vector<16x1xf32> to vector<16x16xf32>
    %19 = arith.subf %15, %18 : vector<16x16xf32>
    %20 = math.exp %19 : vector<16x16xf32>
    %cst_19 = arith.constant dense<0.000000e+00> : vector<16xf32>
    %21 = vector.multi_reduction <add>, %20, %cst_19 [1] : vector<16x16xf32> to vector<16xf32>
    %22 = vector.shape_cast %21 : vector<16xf32> to vector<16x1xf32>
    %23 = tpu.reciprocal %22 {approx = true} : vector<16x1xf32> -> vector<16x1xf32>
    %24 = vector.broadcast %23 : vector<16x1xf32> to vector<16x16xf32>
    %25 = arith.mulf %20, %24 : vector<16x16xf32>
    %cst_20 = arith.constant dense<0.000000e+00> : vector<16x8xf32>
    %26 = tpu.matmul %25, %14, %cst_20 {dimension_numbers = #tpu.dot_dimension_numbers<[1], [0], [0], [1], [0, 0, 1, 1], [], []>} : vector<16x16xf32>, vector<16x8xf32>, vector<16x8xf32> -> vector<16x8xf32>
    %c0_21 = arith.constant 0 : index
    %c0_22 = arith.constant 0 : index
    %27 = vector.load %arg10[%c0_21, %c0_22] : memref<16x32xf32, #tpu.memory_space<vmem>>, vector<16x8xf32>
    tpu.vector_store %arg10[%c0_21, %c0_22], %26 {strides = array<i32>} : memref<16x32xf32, #tpu.memory_space<vmem>>, vector<16x8xf32>,
    %c1 = arith.constant 1 : index
    %c0_23 = arith.constant 0 : index
    %c0_24 = arith.constant 0 : index
    %28 = vector.load %arg4[%c1, %c0_23, %c0_24] : memref<4x32x8xf32, #tpu.memory_space<vmem>>, vector<1x32x8xf32>
    %29 = vector.shape_cast %28 : vector<1x32x8xf32> to vector<32x8xf32>
    %cst_25 = arith.constant dense<0.000000e+00> : vector<16x8xf32>
    %30 = tpu.matmul %1, %29, %cst_25 {dimension_numbers = #tpu.dot_dimension_numbers<[1], [0], [0], [1], [0, 0, 1, 1], [], []>} : vector<16x32xf32>, vector<32x8xf32>, vector<16x8xf32> -> vector<16x8xf32>
    %cst_26 = arith.constant 0.353553385 : f32
    %31 = vector.broadcast %cst_26 : f32 to vector<16x8xf32>
    %32 = arith.mulf %30, %31 : vector<16x8xf32>
    %c1_27 = arith.constant 1 : index
    %c0_28 = arith.constant 0 : index
    %c0_29 = arith.constant 0 : index
    %33 = vector.load %arg5[%c1_27, %c0_28, %c0_29] : memref<4x32x8xf32, #tpu.memory_space<vmem>>, vector<1x32x8xf32>
    %34 = vector.shape_cast %33 : vector<1x32x8xf32> to vector<32x8xf32>
    %cst_30 = arith.constant dense<0.000000e+00> : vector<16x8xf32>
    %35 = tpu.matmul %3, %34, %cst_30 {dimension_numbers = #tpu.dot_dimension_numbers<[1], [0], [0], [1], [0, 0, 1, 1], [], []>} : vector<16x32xf32>, vector<32x8xf32>, vector<16x8xf32> -> vector<16x8xf32>
    %c1_31 = arith.constant 1 : index
    %c0_32 = arith.constant 0 : index
    %c0_33 = arith.constant 0 : index
    %36 = vector.load %arg6[%c1_31, %c0_32, %c0_33] : memref<4x32x8xf32, #tpu.memory_space<vmem>>, vector<1x32x8xf32>
    %37 = vector.shape_cast %36 : vector<1x32x8xf32> to vector<32x8xf32>
    %cst_34 = arith.constant dense<0.000000e+00> : vector<16x8xf32>
    %38 = tpu.matmul %3, %37, %cst_34 {dimension_numbers = #tpu.dot_dimension_numbers<[1], [0], [0], [1], [0, 0, 1, 1], [], []>} : vector<16x32xf32>, vector<32x8xf32>, vector<16x8xf32> -> vector<16x8xf32>
    %cst_35 = arith.constant dense<0.000000e+00> : vector<16x16xf32>
    %39 = tpu.matmul %32, %35, %cst_35 {dimension_numbers = #tpu.dot_dimension_numbers<[1], [1], [0], [0], [0, 0, 1, 0], [], []>} : vector<16x8xf32>, vector<16x8xf32>, vector<16x16xf32> -> vector<16x16xf32>
    %cst_36 = arith.constant dense<0xFF800000> : vector<16xf32>
    %40 = vector.multi_reduction <maximumf>, %39, %cst_36 [1] : vector<16x16xf32> to vector<16xf32>
    %41 = vector.shape_cast %40 : vector<16xf32> to vector<16x1xf32>
    %42 = vector.broadcast %41 : vector<16x1xf32> to vector<16x16xf32>
    %43 = arith.subf %39, %42 : vector<16x16xf32>
    %44 = math.exp %43 : vector<16x16xf32>
    %cst_37 = arith.constant dense<0.000000e+00> : vector<16xf32>
    %45 = vector.multi_reduction <add>, %44, %cst_37 [1] : vector<16x16xf32> to vector<16xf32>
    %46 = vector.shape_cast %45 : vector<16xf32> to vector<16x1xf32>
    %47 = tpu.reciprocal %46 {approx = true} : vector<16x1xf32> -> vector<16x1xf32>
    %48 = vector.broadcast %47 : vector<16x1xf32> to vector<16x16xf32>
    %49 = arith.mulf %44, %48 : vector<16x16xf32>
    %cst_38 = arith.constant dense<0.000000e+00> : vector<16x8xf32>
    %50 = tpu.matmul %49, %38, %cst_38 {dimension_numbers = #tpu.dot_dimension_numbers<[1], [0], [0], [1], [0, 0, 1, 1], [], []>} : vector<16x16xf32>, vector<16x8xf32>, vector<16x8xf32> -> vector<16x8xf32>
    %c0_39 = arith.constant 0 : index
    %c8 = arith.constant 8 : index
    %51 = vector.load %arg10[%c0_39, %c8] : memref<16x32xf32, #tpu.memory_space<vmem>>, vector<16x8xf32>
    tpu.vector_store %arg10[%c0_39, %c8], %50 {strides = array<i32>} : memref<16x32xf32, #tpu.memory_space<vmem>>, vector<16x8xf32>,
    %c2 = arith.constant 2 : index
    %c0_40 = arith.constant 0 : index
    %c0_41 = arith.constant 0 : index
    %52 = vector.load %arg4[%c2, %c0_40, %c0_41] : memref<4x32x8xf32, #tpu.memory_space<vmem>>, vector<1x32x8xf32>
    %53 = vector.shape_cast %52 : vector<1x32x8xf32> to vector<32x8xf32>
    %cst_42 = arith.constant dense<0.000000e+00> : vector<16x8xf32>
    %54 = tpu.matmul %1, %53, %cst_42 {dimension_numbers = #tpu.dot_dimension_numbers<[1], [0], [0], [1], [0, 0, 1, 1], [], []>} : vector<16x32xf32>, vector<32x8xf32>, vector<16x8xf32> -> vector<16x8xf32>
    %cst_43 = arith.constant 0.353553385 : f32
    %55 = vector.broadcast %cst_43 : f32 to vector<16x8xf32>
    %56 = arith.mulf %54, %55 : vector<16x8xf32>
    %c2_44 = arith.constant 2 : index
    %c0_45 = arith.constant 0 : index
    %c0_46 = arith.constant 0 : index
    %57 = vector.load %arg5[%c2_44, %c0_45, %c0_46] : memref<4x32x8xf32, #tpu.memory_space<vmem>>, vector<1x32x8xf32>
    %58 = vector.shape_cast %57 : vector<1x32x8xf32> to vector<32x8xf32>
    %cst_47 = arith.constant dense<0.000000e+00> : vector<16x8xf32>
    %59 = tpu.matmul %3, %58, %cst_47 {dimension_numbers = #tpu.dot_dimension_numbers<[1], [0], [0], [1], [0, 0, 1, 1], [], []>} : vector<16x32xf32>, vector<32x8xf32>, vector<16x8xf32> -> vector<16x8xf32>
    %c2_48 = arith.constant 2 : index
    %c0_49 = arith.constant 0 : index
    %c0_50 = arith.constant 0 : index
    %60 = vector.load %arg6[%c2_48, %c0_49, %c0_50] : memref<4x32x8xf32, #tpu.memory_space<vmem>>, vector<1x32x8xf32>
    %61 = vector.shape_cast %60 : vector<1x32x8xf32> to vector<32x8xf32>
    %cst_51 = arith.constant dense<0.000000e+00> : vector<16x8xf32>
    %62 = tpu.matmul %3, %61, %cst_51 {dimension_numbers = #tpu.dot_dimension_numbers<[1], [0], [0], [1], [0, 0, 1, 1], [], []>} : vector<16x32xf32>, vector<32x8xf32>, vector<16x8xf32> -> vector<16x8xf32>
    %cst_52 = arith.constant dense<0.000000e+00> : vector<16x16xf32>
    %63 = tpu.matmul %56, %59, %cst_52 {dimension_numbers = #tpu.dot_dimension_numbers<[1], [1], [0], [0], [0, 0, 1, 0], [], []>} : vector<16x8xf32>, vector<16x8xf32>, vector<16x16xf32> -> vector<16x16xf32>
    %cst_53 = arith.constant dense<0xFF800000> : vector<16xf32>
    %64 = vector.multi_reduction <maximumf>, %63, %cst_53 [1] : vector<16x16xf32> to vector<16xf32>
    %65 = vector.shape_cast %64 : vector<16xf32> to vector<16x1xf32>
    %66 = vector.broadcast %65 : vector<16x1xf32> to vector<16x16xf32>
    %67 = arith.subf %63, %66 : vector<16x16xf32>
    %68 = math.exp %67 : vector<16x16xf32>
    %cst_54 = arith.constant dense<0.000000e+00> : vector<16xf32>
    %69 = vector.multi_reduction <add>, %68, %cst_54 [1] : vector<16x16xf32> to vector<16xf32>
    %70 = vector.shape_cast %69 : vector<16xf32> to vector<16x1xf32>
    %71 = tpu.reciprocal %70 {approx = true} : vector<16x1xf32> -> vector<16x1xf32>
    %72 = vector.broadcast %71 : vector<16x1xf32> to vector<16x16xf32>
    %73 = arith.mulf %68, %72 : vector<16x16xf32>
    %cst_55 = arith.constant dense<0.000000e+00> : vector<16x8xf32>
    %74 = tpu.matmul %73, %62, %cst_55 {dimension_numbers = #tpu.dot_dimension_numbers<[1], [0], [0], [1], [0, 0, 1, 1], [], []>} : vector<16x16xf32>, vector<16x8xf32>, vector<16x8xf32> -> vector<16x8xf32>
    %c0_56 = arith.constant 0 : index
    %c16 = arith.constant 16 : index
    %75 = vector.load %arg10[%c0_56, %c16] : memref<16x32xf32, #tpu.memory_space<vmem>>, vector<16x8xf32>
    tpu.vector_store %arg10[%c0_56, %c16], %74 {strides = array<i32>} : memref<16x32xf32, #tpu.memory_space<vmem>>, vector<16x8xf32>,
    %c3 = arith.constant 3 : index
    %c0_57 = arith.constant 0 : index
    %c0_58 = arith.constant 0 : index
    %76 = vector.load %arg4[%c3, %c0_57, %c0_58] : memref<4x32x8xf32, #tpu.memory_space<vmem>>, vector<1x32x8xf32>
    %77 = vector.shape_cast %76 : vector<1x32x8xf32> to vector<32x8xf32>
    %cst_59 = arith.constant dense<0.000000e+00> : vector<16x8xf32>
    %78 = tpu.matmul %1, %77, %cst_59 {dimension_numbers = #tpu.dot_dimension_numbers<[1], [0], [0], [1], [0, 0, 1, 1], [], []>} : vector<16x32xf32>, vector<32x8xf32>, vector<16x8xf32> -> vector<16x8xf32>
    %cst_60 = arith.constant 0.353553385 : f32
    %79 = vector.broadcast %cst_60 : f32 to vector<16x8xf32>
    %80 = arith.mulf %78, %79 : vector<16x8xf32>
    %c3_61 = arith.constant 3 : index
    %c0_62 = arith.constant 0 : index
    %c0_63 = arith.constant 0 : index
    %81 = vector.load %arg5[%c3_61, %c0_62, %c0_63] : memref<4x32x8xf32, #tpu.memory_space<vmem>>, vector<1x32x8xf32>
    %82 = vector.shape_cast %81 : vector<1x32x8xf32> to vector<32x8xf32>
    %cst_64 = arith.constant dense<0.000000e+00> : vector<16x8xf32>
    %83 = tpu.matmul %3, %82, %cst_64 {dimension_numbers = #tpu.dot_dimension_numbers<[1], [0], [0], [1], [0, 0, 1, 1], [], []>} : vector<16x32xf32>, vector<32x8xf32>, vector<16x8xf32> -> vector<16x8xf32>
    %c3_65 = arith.constant 3 : index
    %c0_66 = arith.constant 0 : index
    %c0_67 = arith.constant 0 : index
    %84 = vector.load %arg6[%c3_65, %c0_66, %c0_67] : memref<4x32x8xf32, #tpu.memory_space<vmem>>, vector<1x32x8xf32>
    %85 = vector.shape_cast %84 : vector<1x32x8xf32> to vector<32x8xf32>
    %cst_68 = arith.constant dense<0.000000e+00> : vector<16x8xf32>
    %86 = tpu.matmul %3, %85, %cst_68 {dimension_numbers = #tpu.dot_dimension_numbers<[1], [0], [0], [1], [0, 0, 1, 1], [], []>} : vector<16x32xf32>, vector<32x8xf32>, vector<16x8xf32> -> vector<16x8xf32>
    %cst_69 = arith.constant dense<0.000000e+00> : vector<16x16xf32>
    %87 = tpu.matmul %80, %83, %cst_69 {dimension_numbers = #tpu.dot_dimension_numbers<[1], [1], [0], [0], [0, 0, 1, 0], [], []>} : vector<16x8xf32>, vector<16x8xf32>, vector<16x16xf32> -> vector<16x16xf32>
    %cst_70 = arith.constant dense<0xFF800000> : vector<16xf32>
    %88 = vector.multi_reduction <maximumf>, %87, %cst_70 [1] : vector<16x16xf32> to vector<16xf32>
    %89 = vector.shape_cast %88 : vector<16xf32> to vector<16x1xf32>
    %90 = vector.broadcast %89 : vector<16x1xf32> to vector<16x16xf32>
    %91 = arith.subf %87, %90 : vector<16x16xf32>
    %92 = math.exp %91 : vector<16x16xf32>
    %cst_71 = arith.constant dense<0.000000e+00> : vector<16xf32>
    %93 = vector.multi_reduction <add>, %92, %cst_71 [1] : vector<16x16xf32> to vector<16xf32>
    %94 = vector.shape_cast %93 : vector<16xf32> to vector<16x1xf32>
    %95 = tpu.reciprocal %94 {approx = true} : vector<16x1xf32> -> vector<16x1xf32>
    %96 = vector.broadcast %95 : vector<16x1xf32> to vector<16x16xf32>
    %97 = arith.mulf %92, %96 : vector<16x16xf32>
    %cst_72 = arith.constant dense<0.000000e+00> : vector<16x8xf32>
    %98 = tpu.matmul %97, %86, %cst_72 {dimension_numbers = #tpu.dot_dimension_numbers<[1], [0], [0], [1], [0, 0, 1, 1], [], []>} : vector<16x16xf32>, vector<16x8xf32>, vector<16x8xf32> -> vector<16x8xf32>
    %c0_73 = arith.constant 0 : index
    %c24 = arith.constant 24 : index
    %99 = vector.load %arg10[%c0_73, %c24] : memref<16x32xf32, #tpu.memory_space<vmem>>, vector<16x8xf32>
    tpu.vector_store %arg10[%c0_73, %c24], %98 {strides = array<i32>} : memref<16x32xf32, #tpu.memory_space<vmem>>, vector<16x8xf32>,
    %c0_74 = arith.constant 0 : index
    %c0_75 = arith.constant 0 : index
    %100 = vector.load %arg10[%c0_74, %c0_75] : memref<16x32xf32, #tpu.memory_space<vmem>>, vector<16x32xf32>
    %c0_76 = arith.constant 0 : index
    %c0_77 = arith.constant 0 : index
    %101 = vector.load %arg7[%c0_76, %c0_77] : memref<32x32xf32, #tpu.memory_space<vmem>>, vector<32x32xf32>
    %cst_78 = arith.constant dense<0.000000e+00> : vector<16x32xf32>
    %102 = tpu.matmul %100, %101, %cst_78 {dimension_numbers = #tpu.dot_dimension_numbers<[1], [0], [0], [1], [0, 0, 1, 1], [], []>} : vector<16x32xf32>, vector<32x32xf32>, vector<16x32xf32> -> vector<16x32xf32>
    %c0_79 = arith.constant 0 : index
    %c0_80 = arith.constant 0 : index
    %103 = vector.load %arg8[%c0_79, %c0_80] : memref<1x32xf32, #tpu.memory_space<vmem>>, vector<1x32xf32>
    %104 = vector.broadcast %103 : vector<1x32xf32> to vector<16x32xf32>
    %105 = arith.addf %102, %104 : vector<16x32xf32>
    %c0_81 = arith.constant 0 : index
    %c0_82 = arith.constant 0 : index
    %c0_83 = arith.constant 0 : index
    %106 = vector.load %arg9[%c0_81, %c0_82, %c0_83] : memref<1x16x32xf32, #tpu.memory_space<vmem>>, vector<1x16x32xf32>
    %107 = vector.shape_cast %106 : vector<1x16x32xf32> to vector<16x32xf32>
    %108 = vector.shape_cast %105 : vector<16x32xf32> to vector<1x16x32xf32>
    tpu.vector_store %arg9[%c0_81, %c0_82, %c0_83], %108 {strides = array<i32>} : memref<1x16x32xf32, #tpu.memory_space<vmem>>, vector<1x16x32xf32>,
    return
  }
  func.func @transform_0(%arg0: i32, %arg1: i32) -> (i32, i32, i32) {
    %c0_i32 = arith.constant 0 : i32
    %c0_i32_0 = arith.constant 0 : i32
    return %arg0, %arg1, %c0_i32 : i32, i32, i32
  }
  func.func @transform_1(%arg0: i32, %arg1: i32) -> (i32, i32, i32) {
    %c0_i32 = arith.constant 0 : i32
    %c0_i32_0 = arith.constant 0 : i32
    %c0_i32_1 = arith.constant 0 : i32
    return %arg0, %c0_i32, %c0_i32_0 : i32, i32, i32
  }
  func.func @transform_2(%arg0: i32, %arg1: i32) -> (i32, i32, i32) {
    %c0_i32 = arith.constant 0 : i32
    %c0_i32_0 = arith.constant 0 : i32
    %c0_i32_1 = arith.constant 0 : i32
    %c0_i32_2 = arith.constant 0 : i32
    return %c0_i32, %c0_i32_0, %c0_i32_1 : i32, i32, i32
  }
  func.func @transform_3(%arg0: i32, %arg1: i32) -> (i32, i32, i32) {
    %c0_i32 = arith.constant 0 : i32
    %c0_i32_0 = arith.constant 0 : i32
    %c0_i32_1 = arith.constant 0 : i32
    %c0_i32_2 = arith.constant 0 : i32
    return %c0_i32, %c0_i32_0, %c0_i32_1 : i32, i32, i32
  }
  func.func @transform_4(%arg0: i32, %arg1: i32) -> (i32, i32, i32) {
    %c0_i32 = arith.constant 0 : i32
    %c0_i32_0 = arith.constant 0 : i32
    %c0_i32_1 = arith.constant 0 : i32
    %c0_i32_2 = arith.constant 0 : i32
    return %c0_i32, %c0_i32_0, %c0_i32_1 : i32, i32, i32
  }
  func.func @transform_5(%arg0: i32, %arg1: i32) -> (i32, i32) {
    %c0_i32 = arith.constant 0 : i32
    %c0_i32_0 = arith.constant 0 : i32
    %c0_i32_1 = arith.constant 0 : i32
    return %c0_i32, %c0_i32_0 : i32, i32
  }
  func.func @transform_6(%arg0: i32, %arg1: i32) -> (i32, i32) {
    %c0_i32 = arith.constant 0 : i32
    %c0_i32_0 = arith.constant 0 : i32
    %c0_i32_1 = arith.constant 0 : i32
    return %c0_i32, %c0_i32_0 : i32, i32
  }
  func.func @transform_7(%arg0: i32, %arg1: i32) -> (i32, i32, i32) {
    %c0_i32 = arith.constant 0 : i32
    %c0_i32_0 = arith.constant 0 : i32
    return %arg0, %arg1, %c0_i32 : i32, i32, i32
  }
}

</mosaic_0001>

<llo_original>
// kernel: tpu_custom_call.1
$region0: #{tpu_custom_call.1}
  #allocation0 [shape = 'u32[]', space=smem, size = 0x4, offset = 0x4, fixed_abs, tag = 'smem constant byte address 0x4 - core index']
  #allocation1 [shape = 'u32[72,128]{1,0:T(1,128)}', space=vmem, size = 0x9000, scoped, tag = 'internal scratch']
  #allocation2 [shape = 'f32[16,32]{1,0:T(8,128)}', space=vmem, size = 0x2000, scoped, tag = 'scratch operand']
  %s0 = inlined_call_operand.vmem [shape: f32[2,16,32], index: 0, kind: input, shape index: {}]
  %s1 = inlined_call_operand.vmem [shape: f32[2,16,32], index: 1, kind: input, shape index: {}]
  %s2 = inlined_call_operand.vmem [shape: f32[4,32,8], index: 2, kind: input, shape index: {}]
  %s3 = inlined_call_operand.vmem [shape: f32[4,32,8], index: 3, kind: input, shape index: {}]
  %s4 = inlined_call_operand.vmem [shape: f32[4,32,8], index: 4, kind: input, shape index: {}]
  %s5 = inlined_call_operand.vmem [shape: f32[32,32], index: 5, kind: input, shape index: {}]
  %s6 = inlined_call_operand.vmem [shape: f32[1,32], index: 6, kind: input, shape index: {}]
  %s7 = inlined_call_operand.hbm [shape: f32[2,16,32], index: 7, kind: output, shape index: {}]
  %s8 = sld [smem:[#allocation0]]
  $region61: #{tpu_custom_call.1} parent=0
    _
  %s10 = ssub.s32 1, %s8
  %s11 = scalar_select 0, %s10, %s8
  $region1: #{tpu_custom_call.1} parent=0
    #allocation3 [shape = 'u8[16384]{0}', space=vmem, size = 0x4000, scoped, tag = 'output window, operand 0']
    #allocation4 [shape = 's32[2]{0}', space=sflag, size = 0x8, scoped, tag = 'scoped memory for tpu_custom_call.1']
    %12 = vsyncpa [#allocation4], 0
    %s13 = scalar_lea.sflag [#allocation4], 1
    %14 = vsyncpa %s13, 0
    loop: start=0, step=1, limit=4
    $region2: #{tpu_custom_call.1} parent=1 // loop_pre_header
      _
    $region3: #{tpu_custom_call.1} parent=1 // loop_header
      %s16 = sphi 0, %s20
      %p17 = scmp.ge.s32.totalorder %s16, 4
      %s23 = sphi 0, %s35
      %s24 = sphi 0, %s31
      %s25 = sphi 0, %s23
      %s26 = sphi 0, %s24
      %s27 = sphi 0, %s25
      %s28 = sphi 0, %s26
      %s40 = sphi 0, %s42
      %s43 = sphi 0, %s40
      %s44 = sphi 0, %s43
      %s60 = sphi 0, %s44
      %s66 = sphi 0, %s68
      %s69 = sphi 0, %s66
      %s70 = sphi 0, %s69
      %s86 = sphi 0, %s70
      %s90 = sphi 0, %s90
      %s92 = sphi 0, %s90
      %s93 = sphi 0, %s92
      %s107 = sphi 0, %s93
      %s111 = sphi 0, %s111
      %s113 = sphi 0, %s111
      %s114 = sphi 0, %s113
      %s128 = sphi 0, %s114
      %s132 = sphi 0, %s132
      %s134 = sphi 0, %s132
      %s135 = sphi 0, %s134
      %s149 = sphi 0, %s135
      %s153 = sphi 0, %s153
      %s155 = sphi 0, %s153
      %s156 = sphi 0, %s155
      %s170 = sphi 0, %s156
      %s174 = sphi 0, %s174
      %s176 = sphi 0, %s174
      %s177 = sphi 0, %s176
      %s191 = sphi 0, %s177
      %s199 = sphi 0, %s201
      %s202 = sphi 0, %s199
      %s203 = sphi 0, %s202
      %s219 = sphi 0, %s203
    $region4: #{tpu_custom_call.1} parent=1 // loop_header_branch
      %19 = sbr.rel (%p17) target = $region8
    $region5: #{tpu_custom_call.1} parent=1 // loop_body
      %s21 = ssub.s32 %s16, 1
      %s22 = ssub.s32 %s16, 2
      %s29 = sadd.s32 1, %s24
      %p30 = scmp.ge.s32.totalorder %s29, 1
      %s31 = scalar_select %p30, 0, %s29
      %s32 = sadd.s32 1, %s23
      %s33 = scalar_select %p30, %s32, %s23
      %p34 = scmp.ge.s32.totalorder %s33, 2
      %s35 = scalar_select %p34, 0, %s33
      %s36 = ssub.s32 %s23, %s35
      %s37 = ssub.s32 %s24, %s31
      %s38 = sor.u32 %s36, %s37
      %p39 = scmp.eq.s32.totalorder %s38, 0
      %s41 = sadd.s32 %s40, 1
      %s42 = scalar_select %p39, %s40, %s41
      %p45 = pneg %p39
      %p46 = scmp.eq.s32.totalorder %s16, 1
      %p47 = por %p45, %p46
      %p48 = scmp.ne.s32.totalorder %s40, %s43
      %p49 = scmp.eq.s32.totalorder %s16, 0
      %p50 = por %p48, %p49
      %p51 = scmp.ne.s32.totalorder %s40, %s43
      %p52 = scmp.eq.s32.totalorder %s21, 1
      %p53 = por %p51, %p52
      %p54 = scmp.ne.s32.totalorder %s43, %s44
      %p55 = scmp.eq.s32.totalorder %s21, 0
      %p56 = por %p54, %p55
      %p57 = scmp.ne.s32.totalorder %s43, %s44
      %p58 = scmp.eq.s32.totalorder %s22, 1
      %p59 = por %p57, %p58
      %p61 = scmp.ne.s32.totalorder %s44, %s60
      %p62 = scmp.eq.s32.totalorder %s22, 0
      %p63 = por %p61, %p62
      %s64 = ssub.s32 %s23, %s35
      %p65 = scmp.eq.s32.totalorder %s64, 0
      %s67 = sadd.s32 %s66, 1
      %s68 = scalar_select %p65, %s66, %s67
      %p71 = pneg %p65
      %p72 = scmp.eq.s32.totalorder %s16, 1
      %p73 = por %p71, %p72
      %p74 = scmp.ne.s32.totalorder %s66, %s69
      %p75 = scmp.eq.s32.totalorder %s16, 0
      %p76 = por %p74, %p75
      %p77 = scmp.ne.s32.totalorder %s66, %s69
      %p78 = scmp.eq.s32.totalorder %s21, 1
      %p79 = por %p77, %p78
      %p80 = scmp.ne.s32.totalorder %s69, %s70
      %p81 = scmp.eq.s32.totalorder %s21, 0
      %p82 = por %p80, %p81
      %p83 = scmp.ne.s32.totalorder %s69, %s70
      %p84 = scmp.eq.s32.totalorder %s22, 1
      %p85 = por %p83, %p84
      %p87 = scmp.ne.s32.totalorder %s70, %s86
      %p88 = scmp.eq.s32.totalorder %s22, 0
      %p89 = por %p87, %p88
      %s91 = sadd.s32 %s90, 1
      %p94 = scmp.eq.s32.totalorder %s16, 1
      %p95 = scmp.ne.s32.totalorder %s90, %s92
      %p96 = scmp.eq.s32.totalorder %s16, 0
      %p97 = por %p95, %p96
      %p98 = scmp.ne.s32.totalorder %s90, %s92
      %p99 = scmp.eq.s32.totalorder %s21, 1
      %p100 = por %p98, %p99
      %p101 = scmp.ne.s32.totalorder %s92, %s93
      %p102 = scmp.eq.s32.totalorder %s21, 0
      %p103 = por %p101, %p102
      %p104 = scmp.ne.s32.totalorder %s92, %s93
      %p105 = scmp.eq.s32.totalorder %s22, 1
      %p106 = por %p104, %p105
      %p108 = scmp.ne.s32.totalorder %s93, %s107
      %p109 = scmp.eq.s32.totalorder %s22, 0
      %p110 = por %p108, %p109
      %s112 = sadd.s32 %s111, 1
      %p115 = scmp.eq.s32.totalorder %s16, 1
      %p116 = scmp.ne.s32.totalorder %s111, %s113
      %p117 = scmp.eq.s32.totalorder %s16, 0
      %p118 = por %p116, %p117
      %p119 = scmp.ne.s32.totalorder %s111, %s113
      %p120 = scmp.eq.s32.totalorder %s21, 1
      %p121 = por %p119, %p120
      %p122 = scmp.ne.s32.totalorder %s113, %s114
      %p123 = scmp.eq.s32.totalorder %s21, 0
      %p124 = por %p122, %p123
      %p125 = scmp.ne.s32.totalorder %s113, %s114
      %p126 = scmp.eq.s32.totalorder %s22, 1
      %p127 = por %p125, %p126
      %p129 = scmp.ne.s32.totalorder %s114, %s128
      %p130 = scmp.eq.s32.totalorder %s22, 0
      %p131 = por %p129, %p130
      %s133 = sadd.s32 %s132, 1
      %p136 = scmp.eq.s32.totalorder %s16, 1
      %p137 = scmp.ne.s32.totalorder %s132, %s134
      %p138 = scmp.eq.s32.totalorder %s16, 0
      %p139 = por %p137, %p138
      %p140 = scmp.ne.s32.totalorder %s132, %s134
      %p141 = scmp.eq.s32.totalorder %s21, 1
      %p142 = por %p140, %p141
      %p143 = scmp.ne.s32.totalorder %s134, %s135
      %p144 = scmp.eq.s32.totalorder %s21, 0
      %p145 = por %p143, %p144
      %p146 = scmp.ne.s32.totalorder %s134, %s135
      %p147 = scmp.eq.s32.totalorder %s22, 1
      %p148 = por %p146, %p147
      %p150 = scmp.ne.s32.totalorder %s135, %s149
      %p151 = scmp.eq.s32.totalorder %s22, 0
      %p152 = por %p150, %p151
      %s154 = sadd.s32 %s153, 1
      %p157 = scmp.eq.s32.totalorder %s16, 1
      %p158 = scmp.ne.s32.totalorder %s153, %s155
      %p159 = scmp.eq.s32.totalorder %s16, 0
      %p160 = por %p158, %p159
      %p161 = scmp.ne.s32.totalorder %s153, %s155
      %p162 = scmp.eq.s32.totalorder %s21, 1
      %p163 = por %p161, %p162
      %p164 = scmp.ne.s32.totalorder %s155, %s156
      %p165 = scmp.eq.s32.totalorder %s21, 0
      %p166 = por %p164, %p165
      %p167 = scmp.ne.s32.totalorder %s155, %s156
      %p168 = scmp.eq.s32.totalorder %s22, 1
      %p169 = por %p167, %p168
      %p171 = scmp.ne.s32.totalorder %s156, %s170
      %p172 = scmp.eq.s32.totalorder %s22, 0
      %p173 = por %p171, %p172
      %s175 = sadd.s32 %s174, 1
      %p178 = scmp.eq.s32.totalorder %s16, 1
      %p179 = scmp.ne.s32.totalorder %s174, %s176
      %p180 = scmp.eq.s32.totalorder %s16, 0
      %p181 = por %p179, %p180
      %p182 = scmp.ne.s32.totalorder %s174, %s176
      %p183 = scmp.eq.s32.totalorder %s21, 1
      %p184 = por %p182, %p183
      %p185 = scmp.ne.s32.totalorder %s176, %s177
      %p186 = scmp.eq.s32.totalorder %s21, 0
      %p187 = por %p185, %p186
      %p188 = scmp.ne.s32.totalorder %s176, %s177
      %p189 = scmp.eq.s32.totalorder %s22, 1
      %p190 = por %p188, %p189
      %p192 = scmp.ne.s32.totalorder %s177, %s191
      %p193 = scmp.eq.s32.totalorder %s22, 0
      %p194 = por %p192, %p193
      %s195 = ssub.s32 %s23, %s35
      %s196 = ssub.s32 %s24, %s31
      %s197 = sor.u32 %s195, %s196
      %p198 = scmp.eq.s32.totalorder %s197, 0
      %s200 = sadd.s32 %s199, 1
      %s201 = scalar_select %p198, %s199, %s200
      %p204 = pneg %p198
      %p205 = scmp.eq.s32.totalorder %s16, 1
      %p206 = por %p204, %p205
      %p207 = scmp.ne.s32.totalorder %s199, %s202
      %p208 = scmp.eq.s32.totalorder %s16, 0
      %p209 = por %p207, %p208
      %p210 = scmp.ne.s32.totalorder %s199, %s202
      %p211 = scmp.eq.s32.totalorder %s21, 1
      %p212 = por %p210, %p211
      %p213 = scmp.ne.s32.totalorder %s202, %s203
      %p214 = scmp.eq.s32.totalorder %s21, 0
      %p215 = por %p213, %p214
      %p216 = scmp.ne.s32.totalorder %s202, %s203
      %p217 = scmp.eq.s32.totalorder %s22, 1
      %p218 = por %p216, %p217
      %p220 = scmp.ne.s32.totalorder %s203, %s219
      %p221 = scmp.eq.s32.totalorder %s22, 0
      %p222 = por %p220, %p221
      %p223 = scmp.le.s32.totalorder 1, %s16
      %p224 = scmp.lt.s32.totalorder %s16, 3
      %p225 = pnand %p223, %p224
      %p226 = pneg %p225
      // Predicated region
      $region9: #{tpu_custom_call.1} parent=5 // pred_check
        _
      $region10: #{tpu_custom_call.1} parent=5 // pred_check_branch
        %228 = sbr.rel (%p225) target = $region12
      $region11: #{tpu_custom_call.1} parent=5 // pred_region
        %s229 = ssub.s32 %s16, 1
        // Predicated region
        $region13: #{tpu_custom_call.1} parent=11 // pred_check
          %p230 = pneg %p103
        $region14: #{tpu_custom_call.1} parent=11 // pred_check_branch
          %232 = sbr.rel (%p230) target = $region16
        $region15: #{tpu_custom_call.1} parent=11 // pred_region
          _
        $region16: #{tpu_custom_call.1} parent=11 // pred_fallthru
          _
        // Predicated region
        $region17: #{tpu_custom_call.1} parent=11 // pred_check
          %p233 = pneg %p124
        $region18: #{tpu_custom_call.1} parent=11 // pred_check_branch
          %235 = sbr.rel (%p233) target = $region20
        $region19: #{tpu_custom_call.1} parent=11 // pred_region
          _
        $region20: #{tpu_custom_call.1} parent=11 // pred_fallthru
          _
        // Predicated region
        $region21: #{tpu_custom_call.1} parent=11 // pred_check
          %p236 = pneg %p145
        $region22: #{tpu_custom_call.1} parent=11 // pred_check_branch
          %238 = sbr.rel (%p236) target = $region24
        $region23: #{tpu_custom_call.1} parent=11 // pred_region
          _
        $region24: #{tpu_custom_call.1} parent=11 // pred_fallthru
          _
        // Predicated region
        $region25: #{tpu_custom_call.1} parent=11 // pred_check
          %p239 = pneg %p166
        $region26: #{tpu_custom_call.1} parent=11 // pred_check_branch
          %241 = sbr.rel (%p239) target = $region28
        $region27: #{tpu_custom_call.1} parent=11 // pred_region
          _
        $region28: #{tpu_custom_call.1} parent=11 // pred_fallthru
          _
        // Predicated region
        $region29: #{tpu_custom_call.1} parent=11 // pred_check
          %p242 = pneg %p187
        $region30: #{tpu_custom_call.1} parent=11 // pred_check_branch
          %244 = sbr.rel (%p242) target = $region32
        $region31: #{tpu_custom_call.1} parent=11 // pred_region
          _
        $region32: #{tpu_custom_call.1} parent=11 // pred_fallthru
          _
      $region12: #{tpu_custom_call.1} parent=5 // pred_fallthru
        _
      %p245 = scmp.lt.s32.totalorder %s16, 2
      // Predicated region
      $region33: #{tpu_custom_call.1} parent=5 // pred_check
        %p246 = pneg %p245
      $region34: #{tpu_custom_call.1} parent=5 // pred_check_branch
        %248 = sbr.rel (%p246) target = $region36
      $region35: #{tpu_custom_call.1} parent=5 // pred_region
        // Predicated region
        $region37: #{tpu_custom_call.1} parent=35 // pred_check
          %p249 = pneg %p50
        $region38: #{tpu_custom_call.1} parent=35 // pred_check_branch
          %251 = sbr.rel (%p249) target = $region40
        $region39: #{tpu_custom_call.1} parent=35 // pred_region
          %s252 = smul.u32 2, %s24
          %p253 = scmp.lt.s32.totalorder %s23, 1
          %s254 = scalar_select %p253, %s23, 1
          %p255 = scmp.lt.s32.totalorder %s252, 1
          %s256 = scalar_select %p255, %s252, 1
          %s257 = smul.addr %s254, 2
          %s258 = sadd.s32 %s256, %s257
          %s259 = smul.addr %s258, 8
          %s260 = scalar_lea.vmem %s0, %s259
          %s261 = smul.u32 2, %s24
        $region40: #{tpu_custom_call.1} parent=35 // pred_fallthru
          _
        // Predicated region
        $region41: #{tpu_custom_call.1} parent=35 // pred_check
          %p262 = pneg %p76
        $region42: #{tpu_custom_call.1} parent=35 // pred_check_branch
          %264 = sbr.rel (%p262) target = $region44
        $region43: #{tpu_custom_call.1} parent=35 // pred_region
          %p265 = scmp.lt.s32.totalorder %s23, 1
          %s266 = scalar_select %p265, %s23, 1
          %s267 = smul.addr %s266, 2
          %s268 = smul.addr %s267, 8
          %s269 = scalar_lea.vmem %s1, %s268
        $region44: #{tpu_custom_call.1} parent=35 // pred_fallthru
          _
      $region36: #{tpu_custom_call.1} parent=5 // pred_fallthru
        _
      %p270 = scmp.le.s32.totalorder 1, %s16
      %p271 = scmp.lt.s32.totalorder %s16, 3
      %p272 = pnand %p270, %p271
      %p273 = pneg %p272
      // Predicated region
      $region45: #{tpu_custom_call.1} parent=5 // pred_check
        _
      $region46: #{tpu_custom_call.1} parent=5 // pred_check_branch
        %275 = sbr.rel (%p272) target = $region48
      $region47: #{tpu_custom_call.1} parent=5 // pred_region
        %s276 = ssub.s32 %s16, 1
        %s277 = smul.u32 2, %s26
        %p278 = scmp.lt.s32.totalorder %s25, 1
        %s279 = scalar_select %p278, %s25, 1
        %p280 = scmp.lt.s32.totalorder %s277, 1
        %s281 = scalar_select %p280, %s277, 1
        %s282 = smul.addr %s279, 2
        %s283 = sadd.s32 %s281, %s282
        %s284 = smul.addr %s283, 8
        %s285 = scalar_lea.vmem %s0, %s284
        %p286 = pneg %p56
        %p287 = pneg %p53
        %p288 = scmp.lt.s32.totalorder %s25, 1
        %s289 = scalar_select %p288, %s25, 1
        %s290 = smul.addr %s289, 2
        %s291 = smul.addr %s290, 8
        %s292 = scalar_lea.vmem %s1, %s291
        %p293 = pneg %p82
        %p294 = pneg %p79
        %p295 = pneg %p103
        %p296 = pneg %p100
        %p297 = pneg %p124
        %p298 = pneg %p121
        %p299 = pneg %p145
        %p300 = pneg %p142
        %p301 = pneg %p166
        %p302 = pneg %p163
        %p303 = pneg %p187
        %p304 = pneg %p184
        %p305 = pneg %p215
        %p306 = pneg %p212
        %s307 = sand.u32 %s202, 1
        %s308 = scalar_lea.sflag [#allocation4], %s307
        %s309 = sand.u32 %s202, 1
        %s310 = smul.addr %s309, 16
        %s311 = scalar_lea.vmem [#allocation3], %s310
        %s312 = smul.u32 2, %s26
        %p313 = scmp.lt.s32.totalorder %s25, 1
        %s314 = scalar_select %p313, %s25, 1
        %p315 = scmp.lt.s32.totalorder %s312, 1
        %s316 = scalar_select %p315, %s312, 1
        %s317 = smul.addr %s314, 2
        %s318 = sadd.s32 %s316, %s317
        %s319 = smul.addr %s318, 8
        %s320 = scalar_lea.vmem %s0, %s319
        %s321 = smul.u32 2, %s26
        %p322 = scmp.lt.s32.totalorder %s25, 1
        %s323 = scalar_select %p322, %s25, 1
        %s324 = smul.addr %s323, 2
        %s325 = smul.addr %s324, 8
        %s326 = scalar_lea.vmem %s1, %s325
        %s327 = smul.u32 2, %s26
        %v328 = vld [vmem:[%s320] sm:$0xff]
        %v329 = vld [vmem:[%s320 + $0x8] sm:$0xff]
        %v330 = vld [vmem:[%s326] sm:$0xff]
        %v331 = vld [vmem:[%s326 + $0x8] sm:$0xff]
        %v332 = vld [vmem:[%s2] sm:$0xff]
        %v333 = vld [vmem:[%s2 + $0x8] sm:$0xff]
        %v334 = vld [vmem:[%s2 + $0x10] sm:$0xff]
        %v335 = vld [vmem:[%s2 + $0x18] sm:$0xff]
        %vm336 = vcmask 261120
        %v338 = vsel %vm336, %v328, 0
        %v341 = vsel %vm336, %v329, 0
        %343 = vmatpush.msra.mxu0 0.0
        %344 = vmatpush.msra.mxu0 0.0
        %345 = vmatpush.msra.mxu0 0.0
        %346 = vmatpush.msra.mxu0 0.0
        %347 = vmatpush.msra.mxu0 0.0
        %348 = vmatpush.msra.mxu0 0.0
        %349 = vmatpush.msra.mxu0 0.0
        %350 = vmatpush.msra.mxu0 0.0
        %351 = vmatpush.msra.mxu0 0.0
        %352 = vmatpush.msra.mxu0 0.0
        %353 = vmatpush.msra.mxu0 0.0
        %354 = vmatpush.msra.mxu0 0.0
        %355 = vmatpush.msra.mxu0 %v335
        %356 = vmatpush.msra.mxu0 %v334
        %357 = vmatpush.msra.mxu0 %v333
        %358 = vmatpush.msra.mxu0 %v332
        %359 = vmatmul.f32.gmra.mxu0 %v338
        %v360 = vpop.f32.mrf.mxu0
        %v361 = vadd.f32 0.0, %v360
        %362 = vmatmul.f32.gmra.mxu0 %v341
        %v363 = vpop.f32.mrf.mxu0
        %v364 = vadd.f32 0.0, %v363
        %365 = vdwg.mxu0
        %v366 = vmul.f32 %v361, 0.35355338
        %v367 = vmul.f32 %v364, 0.35355338
        %v368 = vld [vmem:[%s3] sm:$0xff]
        %v369 = vld [vmem:[%s3 + $0x8] sm:$0xff]
        %v370 = vld [vmem:[%s3 + $0x10] sm:$0xff]
        %v371 = vld [vmem:[%s3 + $0x18] sm:$0xff]
        %v373 = vsel %vm336, %v330, 0
        %v376 = vsel %vm336, %v331, 0
        %378 = vmatpush.msra.mxu0 0.0
        %379 = vmatpush.msra.mxu0 0.0
        %380 = vmatpush.msra.mxu0 0.0
        %381 = vmatpush.msra.mxu0 0.0
        %382 = vmatpush.msra.mxu0 0.0
        %383 = vmatpush.msra.mxu0 0.0
        %384 = vmatpush.msra.mxu0 0.0
        %385 = vmatpush.msra.mxu0 0.0
        %386 = vmatpush.msra.mxu0 0.0
        %387 = vmatpush.msra.mxu0 0.0
        %388 = vmatpush.msra.mxu0 0.0
        %389 = vmatpush.msra.mxu0 0.0
        %390 = vmatpush.msra.mxu0 %v371
        %391 = vmatpush.msra.mxu0 %v370
        %392 = vmatpush.msra.mxu0 %v369
        %393 = vmatpush.msra.mxu0 %v368
        %394 = vmatmul.f32.gmra.mxu0 %v373
        %v395 = vpop.f32.mrf.mxu0
        %v396 = vadd.f32 0.0, %v395
        %397 = vmatmul.f32.gmra.mxu0 %v376
        %v398 = vpop.f32.mrf.mxu0
        %v399 = vadd.f32 0.0, %v398
        %400 = vdwg.mxu0
        %v401 = vld [vmem:[%s4] sm:$0xff]
        %v402 = vld [vmem:[%s4 + $0x8] sm:$0xff]
        %v403 = vld [vmem:[%s4 + $0x10] sm:$0xff]
        %v404 = vld [vmem:[%s4 + $0x18] sm:$0xff]
        %405 = vmatpush.msra.mxu0 0.0
        %406 = vmatpush.msra.mxu0 0.0
        %407 = vmatpush.msra.mxu0 0.0
        %408 = vmatpush.msra.mxu0 0.0
        %409 = vmatpush.msra.mxu0 0.0
        %410 = vmatpush.msra.mxu0 0.0
        %411 = vmatpush.msra.mxu0 0.0
        %412 = vmatpush.msra.mxu0 0.0
        %413 = vmatpush.msra.mxu0 0.0
        %414 = vmatpush.msra.mxu0 0.0
        %415 = vmatpush.msra.mxu0 0.0
        %416 = vmatpush.msra.mxu0 0.0
        %417 = vmatpush.msra.mxu0 %v404
        %418 = vmatpush.msra.mxu0 %v403
        %419 = vmatpush.msra.mxu0 %v402
        %420 = vmatpush.msra.mxu0 %v401
        %421 = vmatmul.f32.gmra.mxu0 %v373
        %v422 = vpop.f32.mrf.mxu0
        %v423 = vadd.f32 0.0, %v422
        %424 = vmatmul.f32.gmra.mxu0 %v376
        %v425 = vpop.f32.mrf.mxu0
        %v426 = vadd.f32 0.0, %v425
        %427 = vdwg.mxu0
        %vm428 = vcmask 64512
        %v430 = vsel %vm428, %v366, 0
        %v433 = vsel %vm428, %v367, 0
        %v436 = vsel %vm428, %v396, 0
        %v439 = vsel %vm428, %v399, 0
        %441 = vmatpush.xpose.msra.mxu0 0.0
        %442 = vmatpush.xpose.msra.mxu0 0.0
        %443 = vmatpush.xpose.msra.mxu0 0.0
        %444 = vmatpush.xpose.msra.mxu0 0.0
        %445 = vmatpush.xpose.msra.mxu0 0.0
        %446 = vmatpush.xpose.msra.mxu0 0.0
        %447 = vmatpush.xpose.msra.mxu0 0.0
        %448 = vmatpush.xpose.msra.mxu0 0.0
        %449 = vmatpush.xpose.msra.mxu0 0.0
        %450 = vmatpush.xpose.msra.mxu0 0.0
        %451 = vmatpush.xpose.msra.mxu0 0.0
        %452 = vmatpush.xpose.msra.mxu0 0.0
        %453 = vmatpush.xpose.msra.mxu0 0.0
        %454 = vmatpush.xpose.msra.mxu0 0.0
        %455 = vmatpush.xpose.msra.mxu0 %v439
        %456 = vmatpush.xpose.msra.mxu0 %v436
        %457 = vmatmul.f32.gmra.mxu0 %v430
        %v458 = vpop.f32.mrf.mxu0
        %v459 = vadd.f32 0.0, %v458
        %460 = vmatmul.f32.gmra.mxu0 %v433
        %v461 = vpop.f32.mrf.mxu0
        %v462 = vadd.f32 0.0, %v461
        %463 = vdwg.mxu0
        %vm464 = vcmask 130048
        %v465 = vsel %vm464, %v459, -inf
        %466 = vmax.xlane.f32.xlu0 %v465
        %v467 = vpop.xlane.xlu0 %466
        %v468 = vsel %vm464, %v462, -inf
        %469 = vmax.xlane.f32.xlu0 %v468
        %v470 = vpop.xlane.xlu0 %469
        %v471 = vsub.f32 %v459, %v467
        %v472 = vsub.f32 %v462, %v470
        %v473 = vmul.f32 %v471, 1.442695
        %v474 = vpow.pop %v473
        %v475 = vmul.f32 %v472, 1.442695
        %v476 = vpow.pop %v475
        %v477 = vsel %vm464, %v474, 0.0
        %478 = vadd.xlane.f32.xlu0 %v477
        %v479 = vpop.xlane.xlu0 %478
        %v480 = vsel %vm464, %v476, 0.0
        %481 = vadd.xlane.f32.xlu0 %v480
        %v482 = vpop.xlane.xlu0 %481
        %v483 = vrcp.pop %v479
        %v484 = vrcp.pop %v482
        %v485 = vmul.f32 %v474, %v483
        %v486 = vmul.f32 %v476, %v484
        %v488 = vsel %vm464, %v485, 0
        %v491 = vsel %vm464, %v486, 0
        %493 = vmatpush.msra.mxu0 0.0
        %494 = vmatpush.msra.mxu0 0.0
        %495 = vmatpush.msra.mxu0 0.0
        %496 = vmatpush.msra.mxu0 0.0
        %497 = vmatpush.msra.mxu0 0.0
        %498 = vmatpush.msra.mxu0 0.0
        %499 = vmatpush.msra.mxu0 0.0
        %500 = vmatpush.msra.mxu0 0.0
        %501 = vmatpush.msra.mxu0 0.0
        %502 = vmatpush.msra.mxu0 0.0
        %503 = vmatpush.msra.mxu0 0.0
        %504 = vmatpush.msra.mxu0 0.0
        %505 = vmatpush.msra.mxu0 0.0
        %506 = vmatpush.msra.mxu0 0.0
        %507 = vmatpush.msra.mxu0 %v426
        %508 = vmatpush.msra.mxu0 %v423
        %509 = vmatmul.f32.gmra.mxu0 %v488
        %v510 = vpop.f32.mrf.mxu0
        %v511 = vadd.f32 0.0, %v510
        %512 = vmatmul.f32.gmra.mxu0 %v491
        %v513 = vpop.f32.mrf.mxu0
        %v514 = vadd.f32 0.0, %v513
        %515 = vdwg.mxu0
        %516 = vst.msk [vmem:[#allocation2] sm:$0xff] %vm428, %v511
        %517 = vst.msk [vmem:[#allocation2 + $0x8] sm:$0xff] %vm428, %v514
        %s518 = scalar_lea.vmem %s2, 32
        %v519 = vld [vmem:[%s518] sm:$0xff]
        %v520 = vld [vmem:[%s518 + $0x8] sm:$0xff]
        %v521 = vld [vmem:[%s518 + $0x10] sm:$0xff]
        %v522 = vld [vmem:[%s518 + $0x18] sm:$0xff]
        %523 = vmatpush.msra.mxu0 0.0
        %524 = vmatpush.msra.mxu0 0.0
        %525 = vmatpush.msra.mxu0 0.0
        %526 = vmatpush.msra.mxu0 0.0
        %527 = vmatpush.msra.mxu0 0.0
        %528 = vmatpush.msra.mxu0 0.0
        %529 = vmatpush.msra.mxu0 0.0
        %530 = vmatpush.msra.mxu0 0.0
        %531 = vmatpush.msra.mxu0 0.0
        %532 = vmatpush.msra.mxu0 0.0
        %533 = vmatpush.msra.mxu0 0.0
        %534 = vmatpush.msra.mxu0 0.0
        %535 = vmatpush.msra.mxu0 %v522
        %536 = vmatpush.msra.mxu0 %v521
        %537 = vmatpush.msra.mxu0 %v520
        %538 = vmatpush.msra.mxu0 %v519
        %539 = vmatmul.f32.gmra.mxu0 %v338
        %v540 = vpop.f32.mrf.mxu0
        %v541 = vadd.f32 0.0, %v540
        %542 = vmatmul.f32.gmra.mxu0 %v341
        %v543 = vpop.f32.mrf.mxu0
        %v544 = vadd.f32 0.0, %v543
        %545 = vdwg.mxu0
        %v546 = vmul.f32 %v541, 0.35355338
        %v547 = vmul.f32 %v544, 0.35355338
        %s548 = scalar_lea.vmem %s3, 32
        %v549 = vld [vmem:[%s548] sm:$0xff]
        %v550 = vld [vmem:[%s548 + $0x8] sm:$0xff]
        %v551 = vld [vmem:[%s548 + $0x10] sm:$0xff]
        %v552 = vld [vmem:[%s548 + $0x18] sm:$0xff]
        %553 = vmatpush.msra.mxu0 0.0
        %554 = vmatpush.msra.mxu0 0.0
        %555 = vmatpush.msra.mxu0 0.0
        %556 = vmatpush.msra.mxu0 0.0
        %557 = vmatpush.msra.mxu0 0.0
        %558 = vmatpush.msra.mxu0 0.0
        %559 = vmatpush.msra.mxu0 0.0
        %560 = vmatpush.msra.mxu0 0.0
        %561 = vmatpush.msra.mxu0 0.0
        %562 = vmatpush.msra.mxu0 0.0
        %563 = vmatpush.msra.mxu0 0.0
        %564 = vmatpush.msra.mxu0 0.0
        %565 = vmatpush.msra.mxu0 %v552
        %566 = vmatpush.msra.mxu0 %v551
        %567 = vmatpush.msra.mxu0 %v550
        %568 = vmatpush.msra.mxu0 %v549
        %569 = vmatmul.f32.gmra.mxu0 %v373
        %v570 = vpop.f32.mrf.mxu0
        %v571 = vadd.f32 0.0, %v570
        %572 = vmatmul.f32.gmra.mxu0 %v376
        %v573 = vpop.f32.mrf.mxu0
        %v574 = vadd.f32 0.0, %v573
        %575 = vdwg.mxu0
        %s576 = scalar_lea.vmem %s4, 32
        %v577 = vld [vmem:[%s576] sm:$0xff]
        %v578 = vld [vmem:[%s576 + $0x8] sm:$0xff]
        %v579 = vld [vmem:[%s576 + $0x10] sm:$0xff]
        %v580 = vld [vmem:[%s576 + $0x18] sm:$0xff]
        %581 = vmatpush.msra.mxu0 0.0
        %582 = vmatpush.msra.mxu0 0.0
        %583 = vmatpush.msra.mxu0 0.0
        %584 = vmatpush.msra.mxu0 0.0
        %585 = vmatpush.msra.mxu0 0.0
        %586 = vmatpush.msra.mxu0 0.0
        %587 = vmatpush.msra.mxu0 0.0
        %588 = vmatpush.msra.mxu0 0.0
        %589 = vmatpush.msra.mxu0 0.0
        %590 = vmatpush.msra.mxu0 0.0
        %591 = vmatpush.msra.mxu0 0.0
        %592 = vmatpush.msra.mxu0 0.0
        %593 = vmatpush.msra.mxu0 %v580
        %594 = vmatpush.msra.mxu0 %v579
        %595 = vmatpush.msra.mxu0 %v578
        %596 = vmatpush.msra.mxu0 %v577
        %597 = vmatmul.f32.gmra.mxu0 %v373
        %v598 = vpop.f32.mrf.mxu0
        %v599 = vadd.f32 0.0, %v598
        %600 = vmatmul.f32.gmra.mxu0 %v376
        %v601 = vpop.f32.mrf.mxu0
        %v602 = vadd.f32 0.0, %v601
        %603 = vdwg.mxu0
        %v605 = vsel %vm428, %v546, 0
        %v608 = vsel %vm428, %v547, 0
        %v611 = vsel %vm428, %v571, 0
        %v614 = vsel %vm428, %v574, 0
        %616 = vmatpush.xpose.msra.mxu0 0.0
        %617 = vmatpush.xpose.msra.mxu0 0.0
        %618 = vmatpush.xpose.msra.mxu0 0.0
        %619 = vmatpush.xpose.msra.mxu0 0.0
        %620 = vmatpush.xpose.msra.mxu0 0.0
        %621 = vmatpush.xpose.msra.mxu0 0.0
        %622 = vmatpush.xpose.msra.mxu0 0.0
        %623 = vmatpush.xpose.msra.mxu0 0.0
        %624 = vmatpush.xpose.msra.mxu0 0.0
        %625 = vmatpush.xpose.msra.mxu0 0.0
        %626 = vmatpush.xpose.msra.mxu0 0.0
        %627 = vmatpush.xpose.msra.mxu0 0.0
        %628 = vmatpush.xpose.msra.mxu0 0.0
        %629 = vmatpush.xpose.msra.mxu0 0.0
        %630 = vmatpush.xpose.msra.mxu0 %v614
        %631 = vmatpush.xpose.msra.mxu0 %v611
        %632 = vmatmul.f32.gmra.mxu0 %v605
        %v633 = vpop.f32.mrf.mxu0
        %v634 = vadd.f32 0.0, %v633
        %635 = vmatmul.f32.gmra.mxu0 %v608
        %v636 = vpop.f32.mrf.mxu0
        %v637 = vadd.f32 0.0, %v636
        %638 = vdwg.mxu0
        %v639 = vsel %vm464, %v634, -inf
        %640 = vmax.xlane.f32.xlu0 %v639
        %v641 = vpop.xlane.xlu0 %640
        %v642 = vsel %vm464, %v637, -inf
        %643 = vmax.xlane.f32.xlu0 %v642
        %v644 = vpop.xlane.xlu0 %643
        %v645 = vsub.f32 %v634, %v641
        %v646 = vsub.f32 %v637, %v644
        %v647 = vmul.f32 %v645, 1.442695
        %v648 = vpow.pop %v647
        %v649 = vmul.f32 %v646, 1.442695
        %v650 = vpow.pop %v649
        %v651 = vsel %vm464, %v648, 0.0
        %652 = vadd.xlane.f32.xlu0 %v651
        %v653 = vpop.xlane.xlu0 %652
        %v654 = vsel %vm464, %v650, 0.0
        %655 = vadd.xlane.f32.xlu0 %v654
        %v656 = vpop.xlane.xlu0 %655
        %v657 = vrcp.pop %v653
        %v658 = vrcp.pop %v656
        %v659 = vmul.f32 %v648, %v657
        %v660 = vmul.f32 %v650, %v658
        %v662 = vsel %vm464, %v659, 0
        %v665 = vsel %vm464, %v660, 0
        %667 = vmatpush.msra.mxu0 0.0
        %668 = vmatpush.msra.mxu0 0.0
        %669 = vmatpush.msra.mxu0 0.0
        %670 = vmatpush.msra.mxu0 0.0
        %671 = vmatpush.msra.mxu0 0.0
        %672 = vmatpush.msra.mxu0 0.0
        %673 = vmatpush.msra.mxu0 0.0
        %674 = vmatpush.msra.mxu0 0.0
        %675 = vmatpush.msra.mxu0 0.0
        %676 = vmatpush.msra.mxu0 0.0
        %677 = vmatpush.msra.mxu0 0.0
        %678 = vmatpush.msra.mxu0 0.0
        %679 = vmatpush.msra.mxu0 0.0
        %680 = vmatpush.msra.mxu0 0.0
        %681 = vmatpush.msra.mxu0 %v602
        %682 = vmatpush.msra.mxu0 %v599
        %683 = vmatmul.f32.gmra.mxu0 %v662
        %v684 = vpop.f32.mrf.mxu0
        %v685 = vadd.f32 0.0, %v684
        %686 = vmatmul.f32.gmra.mxu0 %v665
        %v687 = vpop.f32.mrf.mxu0
        %v688 = vadd.f32 0.0, %v687
        %689 = vdwg.mxu0
        %692 = vrot.lane.b32.xlu0 %v685, 8
        %v693 = vpop.permute.xlu0 %692
        %694 = vrot.lane.b32.xlu0 %v688, 8
        %v695 = vpop.permute.xlu0 %694
        %vm698 = vcmask 130112
        %699 = vst.msk [vmem:[#allocation2] sm:$0xff] %vm698, %v693
        %700 = vst.msk [vmem:[#allocation2 + $0x8] sm:$0xff] %vm698, %v695
        %s701 = scalar_lea.vmem %s2, 64
        %v702 = vld [vmem:[%s701] sm:$0xff]
        %v703 = vld [vmem:[%s701 + $0x8] sm:$0xff]
        %v704 = vld [vmem:[%s701 + $0x10] sm:$0xff]
        %v705 = vld [vmem:[%s701 + $0x18] sm:$0xff]
        %706 = vmatpush.msra.mxu0 0.0
        %707 = vmatpush.msra.mxu0 0.0
        %708 = vmatpush.msra.mxu0 0.0
        %709 = vmatpush.msra.mxu0 0.0
        %710 = vmatpush.msra.mxu0 0.0
        %711 = vmatpush.msra.mxu0 0.0
        %712 = vmatpush.msra.mxu0 0.0
        %713 = vmatpush.msra.mxu0 0.0
        %714 = vmatpush.msra.mxu0 0.0
        %715 = vmatpush.msra.mxu0 0.0
        %716 = vmatpush.msra.mxu0 0.0
        %717 = vmatpush.msra.mxu0 0.0
        %718 = vmatpush.msra.mxu0 %v705
        %719 = vmatpush.msra.mxu0 %v704
        %720 = vmatpush.msra.mxu0 %v703
        %721 = vmatpush.msra.mxu0 %v702
        %722 = vmatmul.f32.gmra.mxu0 %v338
        %v723 = vpop.f32.mrf.mxu0
        %v724 = vadd.f32 0.0, %v723
        %725 = vmatmul.f32.gmra.mxu0 %v341
        %v726 = vpop.f32.mrf.mxu0
        %v727 = vadd.f32 0.0, %v726
        %728 = vdwg.mxu0
        %v729 = vmul.f32 %v724, 0.35355338
        %v730 = vmul.f32 %v727, 0.35355338
        %s731 = scalar_lea.vmem %s3, 64
        %v732 = vld [vmem:[%s731] sm:$0xff]
        %v733 = vld [vmem:[%s731 + $0x8] sm:$0xff]
        %v734 = vld [vmem:[%s731 + $0x10] sm:$0xff]
        %v735 = vld [vmem:[%s731 + $0x18] sm:$0xff]
        %736 = vmatpush.msra.mxu0 0.0
        %737 = vmatpush.msra.mxu0 0.0
        %738 = vmatpush.msra.mxu0 0.0
        %739 = vmatpush.msra.mxu0 0.0
        %740 = vmatpush.msra.mxu0 0.0
        %741 = vmatpush.msra.mxu0 0.0
        %742 = vmatpush.msra.mxu0 0.0
        %743 = vmatpush.msra.mxu0 0.0
        %744 = vmatpush.msra.mxu0 0.0
        %745 = vmatpush.msra.mxu0 0.0
        %746 = vmatpush.msra.mxu0 0.0
        %747 = vmatpush.msra.mxu0 0.0
        %748 = vmatpush.msra.mxu0 %v735
        %749 = vmatpush.msra.mxu0 %v734
        %750 = vmatpush.msra.mxu0 %v733
        %751 = vmatpush.msra.mxu0 %v732
        %752 = vmatmul.f32.gmra.mxu0 %v373
        %v753 = vpop.f32.mrf.mxu0
        %v754 = vadd.f32 0.0, %v753
        %755 = vmatmul.f32.gmra.mxu0 %v376
        %v756 = vpop.f32.mrf.mxu0
        %v757 = vadd.f32 0.0, %v756
        %758 = vdwg.mxu0
        %s759 = scalar_lea.vmem %s4, 64
        %v760 = vld [vmem:[%s759] sm:$0xff]
        %v761 = vld [vmem:[%s759 + $0x8] sm:$0xff]
        %v762 = vld [vmem:[%s759 + $0x10] sm:$0xff]
        %v763 = vld [vmem:[%s759 + $0x18] sm:$0xff]
        %764 = vmatpush.msra.mxu0 0.0
        %765 = vmatpush.msra.mxu0 0.0
        %766 = vmatpush.msra.mxu0 0.0
        %767 = vmatpush.msra.mxu0 0.0
        %768 = vmatpush.msra.mxu0 0.0
        %769 = vmatpush.msra.mxu0 0.0
        %770 = vmatpush.msra.mxu0 0.0
        %771 = vmatpush.msra.mxu0 0.0
        %772 = vmatpush.msra.mxu0 0.0
        %773 = vmatpush.msra.mxu0 0.0
        %774 = vmatpush.msra.mxu0 0.0
        %775 = vmatpush.msra.mxu0 0.0
        %776 = vmatpush.msra.mxu0 %v763
        %777 = vmatpush.msra.mxu0 %v762
        %778 = vmatpush.msra.mxu0 %v761
        %779 = vmatpush.msra.mxu0 %v760
        %780 = vmatmul.f32.gmra.mxu0 %v373
        %v781 = vpop.f32.mrf.mxu0
        %v782 = vadd.f32 0.0, %v781
        %783 = vmatmul.f32.gmra.mxu0 %v376
        %v784 = vpop.f32.mrf.mxu0
        %v785 = vadd.f32 0.0, %v784
        %786 = vdwg.mxu0
        %v788 = vsel %vm428, %v729, 0
        %v791 = vsel %vm428, %v730, 0
        %v794 = vsel %vm428, %v754, 0
        %v797 = vsel %vm428, %v757, 0
        %799 = vmatpush.xpose.msra.mxu0 0.0
        %800 = vmatpush.xpose.msra.mxu0 0.0
        %801 = vmatpush.xpose.msra.mxu0 0.0
        %802 = vmatpush.xpose.msra.mxu0 0.0
        %803 = vmatpush.xpose.msra.mxu0 0.0
        %804 = vmatpush.xpose.msra.mxu0 0.0
        %805 = vmatpush.xpose.msra.mxu0 0.0
        %806 = vmatpush.xpose.msra.mxu0 0.0
        %807 = vmatpush.xpose.msra.mxu0 0.0
        %808 = vmatpush.xpose.msra.mxu0 0.0
        %809 = vmatpush.xpose.msra.mxu0 0.0
        %810 = vmatpush.xpose.msra.mxu0 0.0
        %811 = vmatpush.xpose.msra.mxu0 0.0
        %812 = vmatpush.xpose.msra.mxu0 0.0
        %813 = vmatpush.xpose.msra.mxu0 %v797
        %814 = vmatpush.xpose.msra.mxu0 %v794
        %815 = vmatmul.f32.gmra.mxu0 %v788
        %v816 = vpop.f32.mrf.mxu0
        %v817 = vadd.f32 0.0, %v816
        %818 = vmatmul.f32.gmra.mxu0 %v791
        %v819 = vpop.f32.mrf.mxu0
        %v820 = vadd.f32 0.0, %v819
        %821 = vdwg.mxu0
        %v822 = vsel %vm464, %v817, -inf
        %823 = vmax.xlane.f32.xlu0 %v822
        %v824 = vpop.xlane.xlu0 %823
        %v825 = vsel %vm464, %v820, -inf
        %826 = vmax.xlane.f32.xlu0 %v825
        %v827 = vpop.xlane.xlu0 %826
        %v828 = vsub.f32 %v817, %v824
        %v829 = vsub.f32 %v820, %v827
        %v830 = vmul.f32 %v828, 1.442695
        %v831 = vpow.pop %v830
        %v832 = vmul.f32 %v829, 1.442695
        %v833 = vpow.pop %v832
        %v834 = vsel %vm464, %v831, 0.0
        %835 = vadd.xlane.f32.xlu0 %v834
        %v836 = vpop.xlane.xlu0 %835
        %v837 = vsel %vm464, %v833, 0.0
        %838 = vadd.xlane.f32.xlu0 %v837
        %v839 = vpop.xlane.xlu0 %838
        %v840 = vrcp.pop %v836
        %v841 = vrcp.pop %v839
        %v842 = vmul.f32 %v831, %v840
        %v843 = vmul.f32 %v833, %v841
        %v845 = vsel %vm464, %v842, 0
        %v848 = vsel %vm464, %v843, 0
        %850 = vmatpush.msra.mxu0 0.0
        %851 = vmatpush.msra.mxu0 0.0
        %852 = vmatpush.msra.mxu0 0.0
        %853 = vmatpush.msra.mxu0 0.0
        %854 = vmatpush.msra.mxu0 0.0
        %855 = vmatpush.msra.mxu0 0.0
        %856 = vmatpush.msra.mxu0 0.0
        %857 = vmatpush.msra.mxu0 0.0
        %858 = vmatpush.msra.mxu0 0.0
        %859 = vmatpush.msra.mxu0 0.0
        %860 = vmatpush.msra.mxu0 0.0
        %861 = vmatpush.msra.mxu0 0.0
        %862 = vmatpush.msra.mxu0 0.0
        %863 = vmatpush.msra.mxu0 0.0
        %864 = vmatpush.msra.mxu0 %v785
        %865 = vmatpush.msra.mxu0 %v782
        %866 = vmatmul.f32.gmra.mxu0 %v845
        %v867 = vpop.f32.mrf.mxu0
        %v868 = vadd.f32 0.0, %v867
        %869 = vmatmul.f32.gmra.mxu0 %v848
        %v870 = vpop.f32.mrf.mxu0
        %v871 = vadd.f32 0.0, %v870
        %872 = vdwg.mxu0
        %875 = vrot.lane.b32.xlu0 %v868, 16
        %v876 = vpop.permute.xlu0 %875
        %877 = vrot.lane.b32.xlu0 %v871, 16
        %v878 = vpop.permute.xlu0 %877
        %vm881 = vcmask 195712
        %882 = vst.msk [vmem:[#allocation2] sm:$0xff] %vm881, %v876
        %883 = vst.msk [vmem:[#allocation2 + $0x8] sm:$0xff] %vm881, %v878
        %s884 = scalar_lea.vmem %s2, 96
        %v885 = vld [vmem:[%s884] sm:$0xff]
        %v886 = vld [vmem:[%s884 + $0x8] sm:$0xff]
        %v887 = vld [vmem:[%s884 + $0x10] sm:$0xff]
        %v888 = vld [vmem:[%s884 + $0x18] sm:$0xff]
        %889 = vmatpush.msra.mxu0 0.0
        %890 = vmatpush.msra.mxu0 0.0
        %891 = vmatpush.msra.mxu0 0.0
        %892 = vmatpush.msra.mxu0 0.0
        %893 = vmatpush.msra.mxu0 0.0
        %894 = vmatpush.msra.mxu0 0.0
        %895 = vmatpush.msra.mxu0 0.0
        %896 = vmatpush.msra.mxu0 0.0
        %897 = vmatpush.msra.mxu0 0.0
        %898 = vmatpush.msra.mxu0 0.0
        %899 = vmatpush.msra.mxu0 0.0
        %900 = vmatpush.msra.mxu0 0.0
        %901 = vmatpush.msra.mxu0 %v888
        %902 = vmatpush.msra.mxu0 %v887
        %903 = vmatpush.msra.mxu0 %v886
        %904 = vmatpush.msra.mxu0 %v885
        %905 = vmatmul.f32.gmra.mxu0 %v338
        %v906 = vpop.f32.mrf.mxu0
        %v907 = vadd.f32 0.0, %v906
        %908 = vmatmul.f32.gmra.mxu0 %v341
        %v909 = vpop.f32.mrf.mxu0
        %v910 = vadd.f32 0.0, %v909
        %911 = vdwg.mxu0
        %v912 = vmul.f32 %v907, 0.35355338
        %v913 = vmul.f32 %v910, 0.35355338
        %s914 = scalar_lea.vmem %s3, 96
        %v915 = vld [vmem:[%s914] sm:$0xff]
        %v916 = vld [vmem:[%s914 + $0x8] sm:$0xff]
        %v917 = vld [vmem:[%s914 + $0x10] sm:$0xff]
        %v918 = vld [vmem:[%s914 + $0x18] sm:$0xff]
        %919 = vmatpush.msra.mxu0 0.0
        %920 = vmatpush.msra.mxu0 0.0
        %921 = vmatpush.msra.mxu0 0.0
        %922 = vmatpush.msra.mxu0 0.0
        %923 = vmatpush.msra.mxu0 0.0
        %924 = vmatpush.msra.mxu0 0.0
        %925 = vmatpush.msra.mxu0 0.0
        %926 = vmatpush.msra.mxu0 0.0
        %927 = vmatpush.msra.mxu0 0.0
        %928 = vmatpush.msra.mxu0 0.0
        %929 = vmatpush.msra.mxu0 0.0
        %930 = vmatpush.msra.mxu0 0.0
        %931 = vmatpush.msra.mxu0 %v918
        %932 = vmatpush.msra.mxu0 %v917
        %933 = vmatpush.msra.mxu0 %v916
        %934 = vmatpush.msra.mxu0 %v915
        %935 = vmatmul.f32.gmra.mxu0 %v373
        %v936 = vpop.f32.mrf.mxu0
        %v937 = vadd.f32 0.0, %v936
        %938 = vmatmul.f32.gmra.mxu0 %v376
        %v939 = vpop.f32.mrf.mxu0
        %v940 = vadd.f32 0.0, %v939
        %941 = vdwg.mxu0
        %s942 = scalar_lea.vmem %s4, 96
        %v943 = vld [vmem:[%s942] sm:$0xff]
        %v944 = vld [vmem:[%s942 + $0x8] sm:$0xff]
        %v945 = vld [vmem:[%s942 + $0x10] sm:$0xff]
        %v946 = vld [vmem:[%s942 + $0x18] sm:$0xff]
        %947 = vmatpush.msra.mxu0 0.0
        %948 = vmatpush.msra.mxu0 0.0
        %949 = vmatpush.msra.mxu0 0.0
        %950 = vmatpush.msra.mxu0 0.0
        %951 = vmatpush.msra.mxu0 0.0
        %952 = vmatpush.msra.mxu0 0.0
        %953 = vmatpush.msra.mxu0 0.0
        %954 = vmatpush.msra.mxu0 0.0
        %955 = vmatpush.msra.mxu0 0.0
        %956 = vmatpush.msra.mxu0 0.0
        %957 = vmatpush.msra.mxu0 0.0
        %958 = vmatpush.msra.mxu0 0.0
        %959 = vmatpush.msra.mxu0 %v946
        %960 = vmatpush.msra.mxu0 %v945
        %961 = vmatpush.msra.mxu0 %v944
        %962 = vmatpush.msra.mxu0 %v943
        %963 = vmatmul.f32.gmra.mxu0 %v373
        %v964 = vpop.f32.mrf.mxu0
        %v965 = vadd.f32 0.0, %v964
        %966 = vmatmul.f32.gmra.mxu0 %v376
        %v967 = vpop.f32.mrf.mxu0
        %v968 = vadd.f32 0.0, %v967
        %969 = vdwg.mxu0
        %v971 = vsel %vm428, %v912, 0
        %v974 = vsel %vm428, %v913, 0
        %v977 = vsel %vm428, %v937, 0
        %v980 = vsel %vm428, %v940, 0
        %982 = vmatpush.xpose.msra.mxu0 0.0
        %983 = vmatpush.xpose.msra.mxu0 0.0
        %984 = vmatpush.xpose.msra.mxu0 0.0
        %985 = vmatpush.xpose.msra.mxu0 0.0
        %986 = vmatpush.xpose.msra.mxu0 0.0
        %987 = vmatpush.xpose.msra.mxu0 0.0
        %988 = vmatpush.xpose.msra.mxu0 0.0
        %989 = vmatpush.xpose.msra.mxu0 0.0
        %990 = vmatpush.xpose.msra.mxu0 0.0
        %991 = vmatpush.xpose.msra.mxu0 0.0
        %992 = vmatpush.xpose.msra.mxu0 0.0
        %993 = vmatpush.xpose.msra.mxu0 0.0
        %994 = vmatpush.xpose.msra.mxu0 0.0
        %995 = vmatpush.xpose.msra.mxu0 0.0
        %996 = vmatpush.xpose.msra.mxu0 %v980
        %997 = vmatpush.xpose.msra.mxu0 %v977
        %998 = vmatmul.f32.gmra.mxu0 %v971
        %v999 = vpop.f32.mrf.mxu0
        %v1000 = vadd.f32 0.0, %v999
        %1001 = vmatmul.f32.gmra.mxu0 %v974
        %v1002 = vpop.f32.mrf.mxu0
        %v1003 = vadd.f32 0.0, %v1002
        %1004 = vdwg.mxu0
        %v1005 = vsel %vm464, %v1000, -inf
        %1006 = vmax.xlane.f32.xlu0 %v1005
        %v1007 = vpop.xlane.xlu0 %1006
        %v1008 = vsel %vm464, %v1003, -inf
        %1009 = vmax.xlane.f32.xlu0 %v1008
        %v1010 = vpop.xlane.xlu0 %1009
        %v1011 = vsub.f32 %v1000, %v1007
        %v1012 = vsub.f32 %v1003, %v1010
        %v1013 = vmul.f32 %v1011, 1.442695
        %v1014 = vpow.pop %v1013
        %v1015 = vmul.f32 %v1012, 1.442695
        %v1016 = vpow.pop %v1015
        %v1017 = vsel %vm464, %v1014, 0.0
        %1018 = vadd.xlane.f32.xlu0 %v1017
        %v1019 = vpop.xlane.xlu0 %1018
        %v1020 = vsel %vm464, %v1016, 0.0
        %1021 = vadd.xlane.f32.xlu0 %v1020
        %v1022 = vpop.xlane.xlu0 %1021
        %v1023 = vrcp.pop %v1019
        %v1024 = vrcp.pop %v1022
        %v1025 = vmul.f32 %v1014, %v1023
        %v1026 = vmul.f32 %v1016, %v1024
        %v1028 = vsel %vm464, %v1025, 0
        %v1031 = vsel %vm464, %v1026, 0
        %1033 = vmatpush.msra.mxu0 0.0
        %1034 = vmatpush.msra.mxu0 0.0
        %1035 = vmatpush.msra.mxu0 0.0
        %1036 = vmatpush.msra.mxu0 0.0
        %1037 = vmatpush.msra.mxu0 0.0
        %1038 = vmatpush.msra.mxu0 0.0
        %1039 = vmatpush.msra.mxu0 0.0
        %1040 = vmatpush.msra.mxu0 0.0
        %1041 = vmatpush.msra.mxu0 0.0
        %1042 = vmatpush.msra.mxu0 0.0
        %1043 = vmatpush.msra.mxu0 0.0
        %1044 = vmatpush.msra.mxu0 0.0
        %1045 = vmatpush.msra.mxu0 0.0
        %1046 = vmatpush.msra.mxu0 0.0
        %1047 = vmatpush.msra.mxu0 %v968
        %1048 = vmatpush.msra.mxu0 %v965
        %1049 = vmatmul.f32.gmra.mxu0 %v1028
        %v1050 = vpop.f32.mrf.mxu0
        %v1051 = vadd.f32 0.0, %v1050
        %1052 = vmatmul.f32.gmra.mxu0 %v1031
        %v1053 = vpop.f32.mrf.mxu0
        %v1054 = vadd.f32 0.0, %v1053
        %1055 = vdwg.mxu0
        %1058 = vrot.lane.b32.xlu0 %v1051, 24
        %v1059 = vpop.permute.xlu0 %1058
        %1060 = vrot.lane.b32.xlu0 %v1054, 24
        %v1061 = vpop.permute.xlu0 %1060
        %vm1064 = vcmask 261312
        %1065 = vst.msk [vmem:[#allocation2] sm:$0xff] %vm1064, %v1059
        %1066 = vst.msk [vmem:[#allocation2 + $0x8] sm:$0xff] %vm1064, %v1061
        %v1067 = vld [vmem:[#allocation2] sm:$0xff]
        %v1068 = vld [vmem:[#allocation2 + $0x8] sm:$0xff]
        %v1069 = vld [vmem:[%s5] sm:$0xff]
        %v1070 = vld [vmem:[%s5 + $0x8] sm:$0xff]
        %v1071 = vld [vmem:[%s5 + $0x10] sm:$0xff]
        %v1072 = vld [vmem:[%s5 + $0x18] sm:$0xff]
        %v1073 = vld [vmem:[%s6] sm:$0x1]
        %v1075 = vperm.slane %v1073, 0
        %v1078 = vsel %vm336, %v1067, 0
        %v1081 = vsel %vm336, %v1068, 0
        %1083 = vmatpush.msra.mxu0 0.0
        %1084 = vmatpush.msra.mxu0 0.0
        %1085 = vmatpush.msra.mxu0 0.0
        %1086 = vmatpush.msra.mxu0 0.0
        %1087 = vmatpush.msra.mxu0 0.0
        %1088 = vmatpush.msra.mxu0 0.0
        %1089 = vmatpush.msra.mxu0 0.0
        %1090 = vmatpush.msra.mxu0 0.0
        %1091 = vmatpush.msra.mxu0 0.0
        %1092 = vmatpush.msra.mxu0 0.0
        %1093 = vmatpush.msra.mxu0 0.0
        %1094 = vmatpush.msra.mxu0 0.0
        %1095 = vmatpush.msra.mxu0 %v1072
        %1096 = vmatpush.msra.mxu0 %v1071
        %1097 = vmatpush.msra.mxu0 %v1070
        %1098 = vmatpush.msra.mxu0 %v1069
        %1099 = vmatmul.f32.gmra.mxu0 %v1078
        %v1100 = vpop.f32.mrf.mxu0
        %v1101 = vadd.f32 %v1075, %v1100
        %1102 = vmatmul.f32.gmra.mxu0 %v1081
        %v1103 = vpop.f32.mrf.mxu0
        %v1104 = vadd.f32 %v1075, %v1103
        %1105 = vdwg.mxu0
        %1106 = vst.msk [vmem:[%s311] sm:$0xff] %vm336, %v1101
        %1107 = vst.msk [vmem:[%s311 + $0x8] sm:$0xff] %vm336, %v1104
        %s1108 = sand.u32 %s202, 1
        %s1109 = scalar_lea.sflag [#allocation4], %s1108
        %s1110 = sand.u32 %s202, 1
        %s1111 = smul.addr %s1110, 16
        %s1112 = scalar_lea.vmem [#allocation3], %s1111
        // Predicated region
        $region49: #{tpu_custom_call.1} parent=47 // pred_check
          %p1113 = pneg %p212
        $region50: #{tpu_custom_call.1} parent=47 // pred_check_branch
          %1115 = sbr.rel (%p1113) target = $region52
        $region51: #{tpu_custom_call.1} parent=47 // pred_region
          %s1116 = smul.u32 2, %s26
          %1118 = vsyncadd %s1109, 0
          %s1119 = smul.addr %s25, 2
          %s1120 = sadd.s32 %s1116, %s1119
          %s1121 = smul.addr %s1120, 8
          %s1122 = scalar_lea.hbm %s7, %s1121
          %s1123 = sshll.u32 %s1112, 4
          %s1124 = int_to_ptr.vmem [resolvable:$true] %s1123
          %s1125 = sshll.u32 %s1122, 4
          %s1126 = int_to_ptr.hbm [resolvable:$true] %s1125
          %1131 = dma.vmem_to_hbm [thread:$0]  %s1124, 256, %s1126, %s1109, 128, 128, 8
        $region52: #{tpu_custom_call.1} parent=47 // pred_fallthru
          _
      $region48: #{tpu_custom_call.1} parent=5 // pred_fallthru
        _
      %p1132 = scmp.le.s32.totalorder 2, %s16
      // Predicated region
      $region53: #{tpu_custom_call.1} parent=5 // pred_check
        %p1133 = pneg %p1132
      $region54: #{tpu_custom_call.1} parent=5 // pred_check_branch
        %1135 = sbr.rel (%p1133) target = $region56
      $region55: #{tpu_custom_call.1} parent=5 // pred_region
        %s1136 = ssub.s32 %s16, 2
        // Predicated region
        $region57: #{tpu_custom_call.1} parent=55 // pred_check
          %p1137 = pneg %p218
        $region58: #{tpu_custom_call.1} parent=55 // pred_check_branch
          %1139 = sbr.rel (%p1137) target = $region60
        $region59: #{tpu_custom_call.1} parent=55 // pred_region
          %s1140 = sand.u32 %s203, 1
          %s1141 = scalar_lea.sflag [#allocation4], %s1140
          %s1142 = sand.u32 %s203, 1
          %s1143 = smul.addr %s1142, 16
          %s1144 = scalar_lea.vmem [#allocation3], %s1143
          %1146 = dma.done %s1141, 256
        $region60: #{tpu_custom_call.1} parent=55 // pred_fallthru
          _
      $region56: #{tpu_custom_call.1} parent=5 // pred_fallthru
        _
    $region6: #{tpu_custom_call.1} parent=1 // loop_footer
      %s20 = sadd.s32 1, %s16
    $region7: #{tpu_custom_call.1} parent=1 // loop_footer_branch
      %15 = sbr.rel target = $region3
    $region8: #{tpu_custom_call.1} parent=1 // loop_exit
      _
    %1147 = vsyncpa [#allocation4], 1
    %s1148 = scalar_lea.sflag [#allocation4], 1
    %1149 = vsyncpa %s1148, 1

</llo_original>
